<compile_context>
chip_gen: v5e
topology: v5e:2x2
jax: 0.10.0
libtpu: 0.0.40
codegen_flags: <defaults>
</compile_context>

<pallas_src>
import functools

import jax
import jax.numpy as jnp
from jax import lax
from jax.experimental import pallas as pl
from jax.experimental.pallas import tpu as pltpu


# ----------------------------- Pallas kernel ------------------------------- #
def _convg1_kernel(pT_ref, w_ref, params_ref, xlat_ref,
                   y_ref, u_ref, mu_ref, std_ref):
    """One grid step = one (Cout_p, tile_m) lane-dense slab of one image.

    pT_ref     : (K, tile_m)       K = Cin*kH*kW, spatial positions on lanes
    w_ref      : (Cout_p, K)       conv weight, taps fused into one K dim
    params_ref : (Cout_p, 11)      [bias | w1[0..4] | w2[0..4]] per channel
    xlat_ref   : (Cout_p, tile_m)  lateral input
    outputs    : (Cout_p, tile_m)  y, u, mu, std
    """
    # Single fused MXU matmul over K = Cin*kH*kW; f32 accumulation.
    u = jnp.dot(w_ref[...], pT_ref[...], preferred_element_type=jnp.float32)
    u = u + params_ref[:, 0:1]                     # bias (lane broadcast)

    # mu = a0*sigmoid(a1*u + a2) + a3*u + a4
    a0, a1, a2, a3, a4 = (params_ref[:, 1 + i:2 + i] for i in range(5))
    mu = a0 * jax.nn.sigmoid(a1 * u + a2) + a3 * u + a4

    # std = b0*sigmoid(b1*u + b2) + b3*u + b4
    b0, b1, b2, b3, b4 = (params_ref[:, 6 + i:7 + i] for i in range(5))
    std = b0 * jax.nn.sigmoid(b1 * u + b2) + b3 * u + b4

    y = xlat_ref[...] * std + mu * (1.0 - std)

    y_ref[...] = y.astype(y_ref.dtype)
    u_ref[...] = u.astype(u_ref.dtype)
    mu_ref[...] = mu.astype(mu_ref.dtype)
    std_ref[...] = std.astype(std_ref.dtype)


# ------------------------------ wrapper (glue) ------------------------------ #
def _round_up(a, b):
    return (a + b - 1) // b * b


@functools.partial(jax.jit,
                   static_argnames=("stride", "max_tile_m", "matmul_dtype"))
def convg1_forward(x_top, x_lat, conv_w, conv_b, w1, w2, *, stride=1,
                   max_tile_m=2048, matmul_dtype=jnp.float32):
    """Forward pass of ConvG1.

    x_top : (N, Cin, H, W)        NCHW, like PyTorch
    x_lat : (N, Cout, Hout, Wout)
    conv_w: (Cout, Cin, kH, kW)   OIHW, like PyTorch
    conv_b: (Cout,)
    w1,w2 : (5, Cout)             the five (1,Cout,1,1) params, flattened
    matmul_dtype: jnp.float32 or jnp.bfloat16 (bf16 MXU path for v6e/v7x).
    returns (y, u, (mu, std)), each (N, Cout, Hout, Wout) float32.
    """
    N, Cin, H, W = x_top.shape
    Cout, _, kH, kW = conv_w.shape
    Hout = (H - kH) // stride + 1
    Wout = (W - kW) // stride + 1
    HW = Hout * Wout
    K = Cin * kH * kW

    # --- lane-dense tiling over the per-image spatial dim --- #
    n_m = pl.cdiv(HW, max_tile_m)                  # lane tiles per image
    tile_m = _round_up(pl.cdiv(HW, n_m), 128)      # 128-aligned lane tile
    Mp = n_m * tile_m
    Cout_p = _round_up(Cout, 8)                    # sublane-aligned channels

    # --- glue: lane-dense im2col-transpose (N, K, Mp); taps ordered (ci,kh,kw)
    #     to match conv_w.reshape(Cout, Cin*kH*kW). --- #
    taps = []
    for kh in range(kH):
        for kw in range(kW):
            sl = x_top[:, :,
                       kh:kh + (Hout - 1) * stride + 1:stride,
                       kw:kw + (Wout - 1) * stride + 1:stride]
            taps.append(sl.reshape(N, Cin, HW))
    pT = jnp.stack(taps, axis=2).reshape(N, K, HW)     # (N, Cin*kH*kW, HW)
    if Mp > HW:
        pT = jnp.pad(pT, ((0, 0), (0, 0), (0, Mp - HW)))
    pT = pT.astype(matmul_dtype)

    # Conv weight with taps fused into one contraction dim.
    w_mat = conv_w.reshape(Cout, K)
    if Cout_p > Cout:
        w_mat = jnp.pad(w_mat, ((0, Cout_p - Cout), (0, 0)))
    w_mat = w_mat.astype(matmul_dtype)

    # Pack bias + gating params into one (Cout_p, 11) slab.
    params = jnp.concatenate(
        [conv_b.reshape(Cout, 1), w1.T, w2.T], axis=1).astype(jnp.float32)
    if Cout_p > Cout:
        params = jnp.pad(params, ((0, Cout_p - Cout), (0, 0)))

    # Lateral input: NCHW is already the layout we compute in -> reshape only.
    xlat = x_lat.reshape(N, Cout, HW).astype(jnp.float32)
    if Cout_p > Cout or Mp > HW:
        xlat = jnp.pad(xlat, ((0, 0), (0, Cout_p - Cout), (0, Mp - HW)))

    out_slab = jax.ShapeDtypeStruct((N, Cout_p, Mp), jnp.float32)
    slab_spec = pl.BlockSpec((None, Cout_p, tile_m), lambda n, m: (n, 0, m))

    y_f, u_f, mu_f, std_f = pl.pallas_call(
        _convg1_kernel,
        out_shape=(out_slab, out_slab, out_slab, out_slab),
        grid=(N, n_m),
        in_specs=[
            pl.BlockSpec((None, K, tile_m), lambda n, m: (n, 0, m)),  # patchesT
            pl.BlockSpec((Cout_p, K), lambda n, m: (0, 0)),           # weights
            pl.BlockSpec((Cout_p, 11), lambda n, m: (0, 0)),          # bias+gate
            slab_spec,                                                # x_lat
        ],
        out_specs=(slab_spec, slab_spec, slab_spec, slab_spec),
        compiler_params=pltpu.CompilerParams(
            dimension_semantics=("parallel", "parallel"),
            vmem_limit_bytes=48 * 1024 * 1024),
    )(pT, w_mat, params, xlat)

    def unpack(a):
        return a[:, :Cout, :HW].reshape(N, Cout, Hout, Wout)

    y, u, mu, std = map(unpack, (y_f, u_f, mu_f, std_f))
    return y, u, (mu, std)


# ----------------------------- pure-JAX reference --------------------------- #
def convg1_reference(x_top, x_lat, conv_w, conv_b, w1, w2, stride=1):
    u = lax.conv_general_dilated(
        x_top, conv_w, window_strides=(stride, stride), padding="VALID",
        dimension_numbers=("NCHW", "OIHW", "NCHW"))
    u = u + conv_b.reshape(1, -1, 1, 1)

    def gate(p):
        a0, a1, a2, a3, a4 = [p[i].reshape(1, -1, 1, 1) for i in range(5)]
        return a0 * jax.nn.sigmoid(a1 * u + a2) + a3 * u + a4

    mu, std = gate(w1), gate(w2)
    y = x_lat * std + mu * (1.0 - std)
    return y, u, (mu, std)


# ----------------------------------- main ----------------------------------- #
if __name__ == "__main__":
    # Small shapes consistent with the module's forward:
    #   x_top: (N, Cin, H, W); x_lat matches conv output (N, Cout, Hout, Wout)
    N, Cin, Cout, H, W, K, STRIDE = 2, 4, 8, 16, 16, 3, 1
    Hout = (H - K) // STRIDE + 1
    Wout = (W - K) // STRIDE + 1

    key = jax.random.PRNGKey(0)
    k_xt, k_xl, k_w, k_b, k_w1, k_w2 = jax.random.split(key, 6)

    x_top = jax.random.normal(k_xt, (N, Cin, H, W), jnp.float32)
    x_lat = jax.random.normal(k_xl, (N, Cout, Hout, Wout), jnp.float32)

    conv_w = 0.1 * jax.random.normal(k_w, (Cout, Cin, K, K), jnp.float32)
    conv_b = 0.1 * jax.random.normal(k_b, (Cout,), jnp.float32)
    w1 = jnp.zeros((5, Cout), jnp.float32).at[1].set(1.0) \
        + 0.1 * jax.random.normal(k_w1, (5, Cout), jnp.float32)
    w2 = jnp.zeros((5, Cout), jnp.float32).at[1].set(1.0) \
        + 0.1 * jax.random.normal(k_w2, (5, Cout), jnp.float32)

    y_r, u_r, (mu_r, std_r) = convg1_reference(x_top, x_lat, conv_w, conv_b,
                                               w1, w2, stride=STRIDE)

    # --- f32 MXU path (exact-ish): tight tolerance --- #
    y, u, (mu, std) = convg1_forward(x_top, x_lat, conv_w, conv_b, w1, w2,
                                     stride=STRIDE, matmul_dtype=jnp.float32)
    jax.block_until_ready((y, u, mu, std))
    for a, b in ((y, y_r), (u, u_r), (mu, mu_r), (std, std_r)):
        assert a.shape == b.shape and a.dtype == b.dtype
        assert jnp.allclose(a, b, rtol=1e-3, atol=1e-3)

    # --- bf16 MXU path (v6e/v7x feedback): looser tolerance --- #
    y2, u2, (mu2, std2) = convg1_forward(x_top, x_lat, conv_w, conv_b, w1, w2,
                                         stride=STRIDE,
                                         matmul_dtype=jnp.bfloat16)
    jax.block_until_ready((y2, u2, mu2, std2))
    for a, b in ((y2, y_r), (u2, u_r), (mu2, mu_r), (std2, std_r)):
        assert a.shape == b.shape and a.dtype == b.dtype
        assert jnp.allclose(a, b, rtol=5e-2, atol=5e-2)

    print("KERNEL_OK")
</pallas_src>

<mosaic_0001>
module attributes {stable_mosaic.version = 11 : i64} {
  func.func @_convg1_kernel(%arg0: i32, %arg1: i32, %arg2: memref<1x36x256xf32, #tpu.memory_space<vmem>>, %arg3: memref<8x36xf32, #tpu.memory_space<vmem>>, %arg4: memref<8x11xf32, #tpu.memory_space<vmem>>, %arg5: memref<1x8x256xf32, #tpu.memory_space<vmem>>, %arg6: memref<1x8x256xf32, #tpu.memory_space<vmem>>, %arg7: memref<1x8x256xf32, #tpu.memory_space<vmem>>, %arg8: memref<1x8x256xf32, #tpu.memory_space<vmem>>, %arg9: memref<1x8x256xf32, #tpu.memory_space<vmem>>) attributes {dimension_semantics = [#tpu.dimension_semantics<parallel>, #tpu.dimension_semantics<parallel>], iteration_bounds = array<i64: 2, 1>, scalar_prefetch = 0 : i64, scratch_operands = 0 : i64, tpu.core_type = #tpu.core_type<tc>, window_params = [{transform_indices = @transform_0, window_bounds = array<i64: 1, 36, 256>}, {pipeline_mode = #tpu.pipeline_mode<synchronous>, transform_indices = @transform_1, window_bounds = array<i64: 8, 36>}, {pipeline_mode = #tpu.pipeline_mode<synchronous>, transform_indices = @transform_2, window_bounds = array<i64: 8, 11>}, {transform_indices = @transform_3, window_bounds = array<i64: 1, 8, 256>}, {transform_indices = @transform_4, window_bounds = array<i64: 1, 8, 256>}, {transform_indices = @transform_5, window_bounds = array<i64: 1, 8, 256>}, {transform_indices = @transform_6, window_bounds = array<i64: 1, 8, 256>}, {transform_indices = @transform_7, window_bounds = array<i64: 1, 8, 256>}]} {
    %c0 = arith.constant 0 : index
    %c0_0 = arith.constant 0 : index
    %0 = vector.load %arg3[%c0, %c0_0] : memref<8x36xf32, #tpu.memory_space<vmem>>, vector<8x36xf32>
    %c0_1 = arith.constant 0 : index
    %c0_2 = arith.constant 0 : index
    %c0_3 = arith.constant 0 : index
    %1 = vector.load %arg2[%c0_1, %c0_2, %c0_3] : memref<1x36x256xf32, #tpu.memory_space<vmem>>, vector<1x36x256xf32>
    %2 = vector.shape_cast %1 : vector<1x36x256xf32> to vector<36x256xf32>
    %cst = arith.constant dense<0.000000e+00> : vector<8x256xf32>
    %3 = tpu.matmul %0, %2, %cst {dimension_numbers = #tpu.dot_dimension_numbers<[1], [0], [0], [1], [0, 0, 1, 1], [], []>} : vector<8x36xf32>, vector<36x256xf32>, vector<8x256xf32> -> vector<8x256xf32>
    %c0_4 = arith.constant 0 : index
    %c0_5 = arith.constant 0 : index
    %4 = vector.load %arg4[%c0_4, %c0_5] : memref<8x11xf32, #tpu.memory_space<vmem>>, vector<8x1xf32>
    %5 = vector.broadcast %4 : vector<8x1xf32> to vector<8x256xf32>
    %6 = arith.addf %3, %5 : vector<8x256xf32>
    %c0_6 = arith.constant 0 : index
    %c1 = arith.constant 1 : index
    %7 = vector.load %arg4[%c0_6, %c1] : memref<8x11xf32, #tpu.memory_space<vmem>>, vector<8x1xf32>
    %c0_7 = arith.constant 0 : index
    %c2 = arith.constant 2 : index
    %8 = vector.load %arg4[%c0_7, %c2] : memref<8x11xf32, #tpu.memory_space<vmem>>, vector<8x1xf32>
    %c0_8 = arith.constant 0 : index
    %c3 = arith.constant 3 : index
    %9 = vector.load %arg4[%c0_8, %c3] : memref<8x11xf32, #tpu.memory_space<vmem>>, vector<8x1xf32>
    %c0_9 = arith.constant 0 : index
    %c4 = arith.constant 4 : index
    %10 = vector.load %arg4[%c0_9, %c4] : memref<8x11xf32, #tpu.memory_space<vmem>>, vector<8x1xf32>
    %c0_10 = arith.constant 0 : index
    %c5 = arith.constant 5 : index
    %11 = vector.load %arg4[%c0_10, %c5] : memref<8x11xf32, #tpu.memory_space<vmem>>, vector<8x1xf32>
    %12 = vector.broadcast %8 : vector<8x1xf32> to vector<8x256xf32>
    %13 = arith.mulf %12, %6 : vector<8x256xf32>
    %14 = vector.broadcast %9 : vector<8x1xf32> to vector<8x256xf32>
    %15 = arith.addf %13, %14 : vector<8x256xf32>
    %16 = arith.negf %15 : vector<8x256xf32>
    %17 = math.exp %16 : vector<8x256xf32>
    %cst_11 = arith.constant 1.000000e+00 : f32
    %18 = vector.broadcast %cst_11 : f32 to vector<8x256xf32>
    %19 = arith.addf %18, %17 : vector<8x256xf32>
    %20 = arith.divf %18, %19 : vector<8x256xf32>
    %21 = vector.broadcast %7 : vector<8x1xf32> to vector<8x256xf32>
    %22 = arith.mulf %21, %20 : vector<8x256xf32>
    %23 = vector.broadcast %10 : vector<8x1xf32> to vector<8x256xf32>
    %24 = arith.mulf %23, %6 : vector<8x256xf32>
    %25 = arith.addf %22, %24 : vector<8x256xf32>
    %26 = vector.broadcast %11 : vector<8x1xf32> to vector<8x256xf32>
    %27 = arith.addf %25, %26 : vector<8x256xf32>
    %c0_12 = arith.constant 0 : index
    %c6 = arith.constant 6 : index
    %28 = vector.load %arg4[%c0_12, %c6] : memref<8x11xf32, #tpu.memory_space<vmem>>, vector<8x1xf32>
    %c0_13 = arith.constant 0 : index
    %c7 = arith.constant 7 : index
    %29 = vector.load %arg4[%c0_13, %c7] : memref<8x11xf32, #tpu.memory_space<vmem>>, vector<8x1xf32>
    %c0_14 = arith.constant 0 : index
    %c8 = arith.constant 8 : index
    %30 = vector.load %arg4[%c0_14, %c8] : memref<8x11xf32, #tpu.memory_space<vmem>>, vector<8x1xf32>
    %c0_15 = arith.constant 0 : index
    %c9 = arith.constant 9 : index
    %31 = vector.load %arg4[%c0_15, %c9] : memref<8x11xf32, #tpu.memory_space<vmem>>, vector<8x1xf32>
    %c0_16 = arith.constant 0 : index
    %c10 = arith.constant 10 : index
    %32 = vector.load %arg4[%c0_16, %c10] : memref<8x11xf32, #tpu.memory_space<vmem>>, vector<8x1xf32>
    %33 = vector.broadcast %29 : vector<8x1xf32> to vector<8x256xf32>
    %34 = arith.mulf %33, %6 : vector<8x256xf32>
    %35 = vector.broadcast %30 : vector<8x1xf32> to vector<8x256xf32>
    %36 = arith.addf %34, %35 : vector<8x256xf32>
    %37 = arith.negf %36 : vector<8x256xf32>
    %38 = math.exp %37 : vector<8x256xf32>
    %cst_17 = arith.constant 1.000000e+00 : f32
    %39 = vector.broadcast %cst_17 : f32 to vector<8x256xf32>
    %40 = arith.addf %39, %38 : vector<8x256xf32>
    %41 = arith.divf %39, %40 : vector<8x256xf32>
    %42 = vector.broadcast %28 : vector<8x1xf32> to vector<8x256xf32>
    %43 = arith.mulf %42, %41 : vector<8x256xf32>
    %44 = vector.broadcast %31 : vector<8x1xf32> to vector<8x256xf32>
    %45 = arith.mulf %44, %6 : vector<8x256xf32>
    %46 = arith.addf %43, %45 : vector<8x256xf32>
    %47 = vector.broadcast %32 : vector<8x1xf32> to vector<8x256xf32>
    %48 = arith.addf %46, %47 : vector<8x256xf32>
    %c0_18 = arith.constant 0 : index
    %c0_19 = arith.constant 0 : index
    %c0_20 = arith.constant 0 : index
    %49 = vector.load %arg5[%c0_18, %c0_19, %c0_20] : memref<1x8x256xf32, #tpu.memory_space<vmem>>, vector<1x8x256xf32>
    %50 = vector.shape_cast %49 : vector<1x8x256xf32> to vector<8x256xf32>
    %51 = arith.mulf %50, %48 : vector<8x256xf32>
    %cst_21 = arith.constant 1.000000e+00 : f32
    %52 = vector.broadcast %cst_21 : f32 to vector<8x256xf32>
    %53 = arith.subf %52, %48 : vector<8x256xf32>
    %54 = arith.mulf %27, %53 : vector<8x256xf32>
    %55 = arith.addf %51, %54 : vector<8x256xf32>
    %c0_22 = arith.constant 0 : index
    %c0_23 = arith.constant 0 : index
    %c0_24 = arith.constant 0 : index
    %56 = vector.load %arg6[%c0_22, %c0_23, %c0_24] : memref<1x8x256xf32, #tpu.memory_space<vmem>>, vector<1x8x256xf32>
    %57 = vector.shape_cast %56 : vector<1x8x256xf32> to vector<8x256xf32>
    %58 = vector.shape_cast %55 : vector<8x256xf32> to vector<1x8x256xf32>
    tpu.vector_store %arg6[%c0_22, %c0_23, %c0_24], %58 {strides = array<i32>} : memref<1x8x256xf32, #tpu.memory_space<vmem>>, vector<1x8x256xf32>,
    %c0_25 = arith.constant 0 : index
    %c0_26 = arith.constant 0 : index
    %c0_27 = arith.constant 0 : index
    %59 = vector.load %arg7[%c0_25, %c0_26, %c0_27] : memref<1x8x256xf32, #tpu.memory_space<vmem>>, vector<1x8x256xf32>
    %60 = vector.shape_cast %59 : vector<1x8x256xf32> to vector<8x256xf32>
    %61 = vector.shape_cast %6 : vector<8x256xf32> to vector<1x8x256xf32>
    tpu.vector_store %arg7[%c0_25, %c0_26, %c0_27], %61 {strides = array<i32>} : memref<1x8x256xf32, #tpu.memory_space<vmem>>, vector<1x8x256xf32>,
    %c0_28 = arith.constant 0 : index
    %c0_29 = arith.constant 0 : index
    %c0_30 = arith.constant 0 : index
    %62 = vector.load %arg8[%c0_28, %c0_29, %c0_30] : memref<1x8x256xf32, #tpu.memory_space<vmem>>, vector<1x8x256xf32>
    %63 = vector.shape_cast %62 : vector<1x8x256xf32> to vector<8x256xf32>
    %64 = vector.shape_cast %27 : vector<8x256xf32> to vector<1x8x256xf32>
    tpu.vector_store %arg8[%c0_28, %c0_29, %c0_30], %64 {strides = array<i32>} : memref<1x8x256xf32, #tpu.memory_space<vmem>>, vector<1x8x256xf32>,
    %c0_31 = arith.constant 0 : index
    %c0_32 = arith.constant 0 : index
    %c0_33 = arith.constant 0 : index
    %65 = vector.load %arg9[%c0_31, %c0_32, %c0_33] : memref<1x8x256xf32, #tpu.memory_space<vmem>>, vector<1x8x256xf32>
    %66 = vector.shape_cast %65 : vector<1x8x256xf32> to vector<8x256xf32>
    %67 = vector.shape_cast %48 : vector<8x256xf32> to vector<1x8x256xf32>
    tpu.vector_store %arg9[%c0_31, %c0_32, %c0_33], %67 {strides = array<i32>} : memref<1x8x256xf32, #tpu.memory_space<vmem>>, vector<1x8x256xf32>,
    return
  }
  func.func @transform_0(%arg0: i32, %arg1: i32) -> (i32, i32, i32) {
    %c0_i32 = arith.constant 0 : i32
    %c0_i32_0 = arith.constant 0 : i32
    return %arg0, %c0_i32, %arg1 : i32, i32, i32
  }
  func.func @transform_1(%arg0: i32, %arg1: i32) -> (i32, i32) {
    %c0_i32 = arith.constant 0 : i32
    %c0_i32_0 = arith.constant 0 : i32
    %c0_i32_1 = arith.constant 0 : i32
    return %c0_i32, %c0_i32_0 : i32, i32
  }
  func.func @transform_2(%arg0: i32, %arg1: i32) -> (i32, i32) {
    %c0_i32 = arith.constant 0 : i32
    %c0_i32_0 = arith.constant 0 : i32
    %c0_i32_1 = arith.constant 0 : i32
    return %c0_i32, %c0_i32_0 : i32, i32
  }
  func.func @transform_3(%arg0: i32, %arg1: i32) -> (i32, i32, i32) {
    %c0_i32 = arith.constant 0 : i32
    %c0_i32_0 = arith.constant 0 : i32
    return %arg0, %c0_i32, %arg1 : i32, i32, i32
  }
  func.func @transform_4(%arg0: i32, %arg1: i32) -> (i32, i32, i32) {
    %c0_i32 = arith.constant 0 : i32
    %c0_i32_0 = arith.constant 0 : i32
    return %arg0, %c0_i32, %arg1 : i32, i32, i32
  }
  func.func @transform_5(%arg0: i32, %arg1: i32) -> (i32, i32, i32) {
    %c0_i32 = arith.constant 0 : i32
    %c0_i32_0 = arith.constant 0 : i32
    return %arg0, %c0_i32, %arg1 : i32, i32, i32
  }
  func.func @transform_6(%arg0: i32, %arg1: i32) -> (i32, i32, i32) {
    %c0_i32 = arith.constant 0 : i32
    %c0_i32_0 = arith.constant 0 : i32
    return %arg0, %c0_i32, %arg1 : i32, i32, i32
  }
  func.func @transform_7(%arg0: i32, %arg1: i32) -> (i32, i32, i32) {
    %c0_i32 = arith.constant 0 : i32
    %c0_i32_0 = arith.constant 0 : i32
    return %arg0, %c0_i32, %arg1 : i32, i32, i32
  }
}

</mosaic_0001>

<llo_original>
// kernel: convg1_forward.1
$region0: #{convg1_forward.1}
  #allocation0 [shape = 'u32[]', space=smem, size = 0x4, offset = 0x4, fixed_abs, tag = 'smem constant byte address 0x4 - core index']
  #allocation1 [shape = 'u32[72,128]{1,0:T(1,128)}', space=vmem, size = 0x9000, scoped, tag = 'internal scratch']
  %s0 = inlined_call_operand.vmem [shape: f32[2,36,256], index: 0, kind: input, shape index: {}]
  %s1 = inlined_call_operand.vmem [shape: f32[8,36], index: 1, kind: input, shape index: {}]
  %s2 = inlined_call_operand.vmem [shape: f32[8,11], index: 2, kind: input, shape index: {}]
  %s3 = inlined_call_operand.vmem [shape: f32[2,8,256], index: 3, kind: input, shape index: {}]
  %s4 = inlined_call_operand.vmem [shape: f32[2,8,256], index: 4, kind: output, shape index: {0}]
  %s5 = inlined_call_operand.vmem [shape: f32[2,8,256], index: 5, kind: output, shape index: {1}]
  %s6 = inlined_call_operand.vmem [shape: f32[2,8,256], index: 6, kind: output, shape index: {2}]
  %s7 = inlined_call_operand.vmem [shape: f32[2,8,256], index: 7, kind: output, shape index: {3}]
  %8 = xla_tuple %s4, %s5, %s6, %s7
  %s9 = sld [smem:[#allocation0]]
  $region73: #{convg1_forward.1} parent=0
    _
  %s11 = ssub.s32 1, %s9
  %s12 = scalar_select 0, %s11, %s9
  loop: start=0, step=1, limit=4
  $region2: #{convg1_forward.1} parent=0 // loop_pre_header
    _
  $region3: #{convg1_forward.1} parent=0 // loop_header
    %s14 = sphi 0, %s18
    %p15 = scmp.ge.s32.totalorder %s14, 4
    %s21 = sphi 0, %s33
    %s22 = sphi 0, %s29
    %s23 = sphi 0, %s21
    %s24 = sphi 0, %s22
    %s25 = sphi 0, %s23
    %s26 = sphi 0, %s24
    %s38 = sphi 0, %s40
    %s41 = sphi 0, %s38
    %s42 = sphi 0, %s41
    %s58 = sphi 0, %s42
    %s62 = sphi 0, %s62
    %s64 = sphi 0, %s62
    %s65 = sphi 0, %s64
    %s79 = sphi 0, %s65
    %s83 = sphi 0, %s83
    %s85 = sphi 0, %s83
    %s86 = sphi 0, %s85
    %s100 = sphi 0, %s86
    %s108 = sphi 0, %s110
    %s111 = sphi 0, %s108
    %s112 = sphi 0, %s111
    %s128 = sphi 0, %s112
    %s136 = sphi 0, %s138
    %s139 = sphi 0, %s136
    %s140 = sphi 0, %s139
    %s156 = sphi 0, %s140
    %s164 = sphi 0, %s166
    %s167 = sphi 0, %s164
    %s168 = sphi 0, %s167
    %s184 = sphi 0, %s168
    %s192 = sphi 0, %s194
    %s195 = sphi 0, %s192
    %s196 = sphi 0, %s195
    %s212 = sphi 0, %s196
    %s220 = sphi 0, %s222
    %s223 = sphi 0, %s220
    %s224 = sphi 0, %s223
    %s240 = sphi 0, %s224
  $region4: #{convg1_forward.1} parent=0 // loop_header_branch
    %17 = sbr.rel (%p15) target = $region8
  $region5: #{convg1_forward.1} parent=0 // loop_body
    %s19 = ssub.s32 %s14, 1
    %s20 = ssub.s32 %s14, 2
    %s27 = sadd.s32 1, %s22
    %p28 = scmp.ge.s32.totalorder %s27, 1
    %s29 = scalar_select %p28, 0, %s27
    %s30 = sadd.s32 1, %s21
    %s31 = scalar_select %p28, %s30, %s21
    %p32 = scmp.ge.s32.totalorder %s31, 2
    %s33 = scalar_select %p32, 0, %s31
    %s34 = ssub.s32 %s21, %s33
    %s35 = ssub.s32 %s22, %s29
    %s36 = sor.u32 %s34, %s35
    %p37 = scmp.eq.s32.totalorder %s36, 0
    %s39 = sadd.s32 %s38, 1
    %s40 = scalar_select %p37, %s38, %s39
    %p43 = pneg %p37
    %p44 = scmp.eq.s32.totalorder %s14, 1
    %p45 = por %p43, %p44
    %p46 = scmp.ne.s32.totalorder %s38, %s41
    %p47 = scmp.eq.s32.totalorder %s14, 0
    %p48 = por %p46, %p47
    %p49 = scmp.ne.s32.totalorder %s38, %s41
    %p50 = scmp.eq.s32.totalorder %s19, 1
    %p51 = por %p49, %p50
    %p52 = scmp.ne.s32.totalorder %s41, %s42
    %p53 = scmp.eq.s32.totalorder %s19, 0
    %p54 = por %p52, %p53
    %p55 = scmp.ne.s32.totalorder %s41, %s42
    %p56 = scmp.eq.s32.totalorder %s20, 1
    %p57 = por %p55, %p56
    %p59 = scmp.ne.s32.totalorder %s42, %s58
    %p60 = scmp.eq.s32.totalorder %s20, 0
    %p61 = por %p59, %p60
    %s63 = sadd.s32 %s62, 1
    %p66 = scmp.eq.s32.totalorder %s14, 1
    %p67 = scmp.ne.s32.totalorder %s62, %s64
    %p68 = scmp.eq.s32.totalorder %s14, 0
    %p69 = por %p67, %p68
    %p70 = scmp.ne.s32.totalorder %s62, %s64
    %p71 = scmp.eq.s32.totalorder %s19, 1
    %p72 = por %p70, %p71
    %p73 = scmp.ne.s32.totalorder %s64, %s65
    %p74 = scmp.eq.s32.totalorder %s19, 0
    %p75 = por %p73, %p74
    %p76 = scmp.ne.s32.totalorder %s64, %s65
    %p77 = scmp.eq.s32.totalorder %s20, 1
    %p78 = por %p76, %p77
    %p80 = scmp.ne.s32.totalorder %s65, %s79
    %p81 = scmp.eq.s32.totalorder %s20, 0
    %p82 = por %p80, %p81
    %s84 = sadd.s32 %s83, 1
    %p87 = scmp.eq.s32.totalorder %s14, 1
    %p88 = scmp.ne.s32.totalorder %s83, %s85
    %p89 = scmp.eq.s32.totalorder %s14, 0
    %p90 = por %p88, %p89
    %p91 = scmp.ne.s32.totalorder %s83, %s85
    %p92 = scmp.eq.s32.totalorder %s19, 1
    %p93 = por %p91, %p92
    %p94 = scmp.ne.s32.totalorder %s85, %s86
    %p95 = scmp.eq.s32.totalorder %s19, 0
    %p96 = por %p94, %p95
    %p97 = scmp.ne.s32.totalorder %s85, %s86
    %p98 = scmp.eq.s32.totalorder %s20, 1
    %p99 = por %p97, %p98
    %p101 = scmp.ne.s32.totalorder %s86, %s100
    %p102 = scmp.eq.s32.totalorder %s20, 0
    %p103 = por %p101, %p102
    %s104 = ssub.s32 %s21, %s33
    %s105 = ssub.s32 %s22, %s29
    %s106 = sor.u32 %s104, %s105
    %p107 = scmp.eq.s32.totalorder %s106, 0
    %s109 = sadd.s32 %s108, 1
    %s110 = scalar_select %p107, %s108, %s109
    %p113 = pneg %p107
    %p114 = scmp.eq.s32.totalorder %s14, 1
    %p115 = por %p113, %p114
    %p116 = scmp.ne.s32.totalorder %s108, %s111
    %p117 = scmp.eq.s32.totalorder %s14, 0
    %p118 = por %p116, %p117
    %p119 = scmp.ne.s32.totalorder %s108, %s111
    %p120 = scmp.eq.s32.totalorder %s19, 1
    %p121 = por %p119, %p120
    %p122 = scmp.ne.s32.totalorder %s111, %s112
    %p123 = scmp.eq.s32.totalorder %s19, 0
    %p124 = por %p122, %p123
    %p125 = scmp.ne.s32.totalorder %s111, %s112
    %p126 = scmp.eq.s32.totalorder %s20, 1
    %p127 = por %p125, %p126
    %p129 = scmp.ne.s32.totalorder %s112, %s128
    %p130 = scmp.eq.s32.totalorder %s20, 0
    %p131 = por %p129, %p130
    %s132 = ssub.s32 %s21, %s33
    %s133 = ssub.s32 %s22, %s29
    %s134 = sor.u32 %s132, %s133
    %p135 = scmp.eq.s32.totalorder %s134, 0
    %s137 = sadd.s32 %s136, 1
    %s138 = scalar_select %p135, %s136, %s137
    %p141 = pneg %p135
    %p142 = scmp.eq.s32.totalorder %s14, 1
    %p143 = por %p141, %p142
    %p144 = scmp.ne.s32.totalorder %s136, %s139
    %p145 = scmp.eq.s32.totalorder %s14, 0
    %p146 = por %p144, %p145
    %p147 = scmp.ne.s32.totalorder %s136, %s139
    %p148 = scmp.eq.s32.totalorder %s19, 1
    %p149 = por %p147, %p148
    %p150 = scmp.ne.s32.totalorder %s139, %s140
    %p151 = scmp.eq.s32.totalorder %s19, 0
    %p152 = por %p150, %p151
    %p153 = scmp.ne.s32.totalorder %s139, %s140
    %p154 = scmp.eq.s32.totalorder %s20, 1
    %p155 = por %p153, %p154
    %p157 = scmp.ne.s32.totalorder %s140, %s156
    %p158 = scmp.eq.s32.totalorder %s20, 0
    %p159 = por %p157, %p158
    %s160 = ssub.s32 %s21, %s33
    %s161 = ssub.s32 %s22, %s29
    %s162 = sor.u32 %s160, %s161
    %p163 = scmp.eq.s32.totalorder %s162, 0
    %s165 = sadd.s32 %s164, 1
    %s166 = scalar_select %p163, %s164, %s165
    %p169 = pneg %p163
    %p170 = scmp.eq.s32.totalorder %s14, 1
    %p171 = por %p169, %p170
    %p172 = scmp.ne.s32.totalorder %s164, %s167
    %p173 = scmp.eq.s32.totalorder %s14, 0
    %p174 = por %p172, %p173
    %p175 = scmp.ne.s32.totalorder %s164, %s167
    %p176 = scmp.eq.s32.totalorder %s19, 1
    %p177 = por %p175, %p176
    %p178 = scmp.ne.s32.totalorder %s167, %s168
    %p179 = scmp.eq.s32.totalorder %s19, 0
    %p180 = por %p178, %p179
    %p181 = scmp.ne.s32.totalorder %s167, %s168
    %p182 = scmp.eq.s32.totalorder %s20, 1
    %p183 = por %p181, %p182
    %p185 = scmp.ne.s32.totalorder %s168, %s184
    %p186 = scmp.eq.s32.totalorder %s20, 0
    %p187 = por %p185, %p186
    %s188 = ssub.s32 %s21, %s33
    %s189 = ssub.s32 %s22, %s29
    %s190 = sor.u32 %s188, %s189
    %p191 = scmp.eq.s32.totalorder %s190, 0
    %s193 = sadd.s32 %s192, 1
    %s194 = scalar_select %p191, %s192, %s193
    %p197 = pneg %p191
    %p198 = scmp.eq.s32.totalorder %s14, 1
    %p199 = por %p197, %p198
    %p200 = scmp.ne.s32.totalorder %s192, %s195
    %p201 = scmp.eq.s32.totalorder %s14, 0
    %p202 = por %p200, %p201
    %p203 = scmp.ne.s32.totalorder %s192, %s195
    %p204 = scmp.eq.s32.totalorder %s19, 1
    %p205 = por %p203, %p204
    %p206 = scmp.ne.s32.totalorder %s195, %s196
    %p207 = scmp.eq.s32.totalorder %s19, 0
    %p208 = por %p206, %p207
    %p209 = scmp.ne.s32.totalorder %s195, %s196
    %p210 = scmp.eq.s32.totalorder %s20, 1
    %p211 = por %p209, %p210
    %p213 = scmp.ne.s32.totalorder %s196, %s212
    %p214 = scmp.eq.s32.totalorder %s20, 0
    %p215 = por %p213, %p214
    %s216 = ssub.s32 %s21, %s33
    %s217 = ssub.s32 %s22, %s29
    %s218 = sor.u32 %s216, %s217
    %p219 = scmp.eq.s32.totalorder %s218, 0
    %s221 = sadd.s32 %s220, 1
    %s222 = scalar_select %p219, %s220, %s221
    %p225 = pneg %p219
    %p226 = scmp.eq.s32.totalorder %s14, 1
    %p227 = por %p225, %p226
    %p228 = scmp.ne.s32.totalorder %s220, %s223
    %p229 = scmp.eq.s32.totalorder %s14, 0
    %p230 = por %p228, %p229
    %p231 = scmp.ne.s32.totalorder %s220, %s223
    %p232 = scmp.eq.s32.totalorder %s19, 1
    %p233 = por %p231, %p232
    %p234 = scmp.ne.s32.totalorder %s223, %s224
    %p235 = scmp.eq.s32.totalorder %s19, 0
    %p236 = por %p234, %p235
    %p237 = scmp.ne.s32.totalorder %s223, %s224
    %p238 = scmp.eq.s32.totalorder %s20, 1
    %p239 = por %p237, %p238
    %p241 = scmp.ne.s32.totalorder %s224, %s240
    %p242 = scmp.eq.s32.totalorder %s20, 0
    %p243 = por %p241, %p242
    %p244 = scmp.le.s32.totalorder 1, %s14
    %p245 = scmp.lt.s32.totalorder %s14, 3
    %p246 = pnand %p244, %p245
    %p247 = pneg %p246
    // Predicated region
    $region9: #{convg1_forward.1} parent=5 // pred_check
      _
    $region10: #{convg1_forward.1} parent=5 // pred_check_branch
      %249 = sbr.rel (%p246) target = $region12
    $region11: #{convg1_forward.1} parent=5 // pred_region
      %s250 = ssub.s32 %s14, 1
      // Predicated region
      $region13: #{convg1_forward.1} parent=11 // pred_check
        %p251 = pneg %p75
      $region14: #{convg1_forward.1} parent=11 // pred_check_branch
        %253 = sbr.rel (%p251) target = $region16
      $region15: #{convg1_forward.1} parent=11 // pred_region
        _
      $region16: #{convg1_forward.1} parent=11 // pred_fallthru
        _
      // Predicated region
      $region17: #{convg1_forward.1} parent=11 // pred_check
        %p254 = pneg %p96
      $region18: #{convg1_forward.1} parent=11 // pred_check_branch
        %256 = sbr.rel (%p254) target = $region20
      $region19: #{convg1_forward.1} parent=11 // pred_region
        _
      $region20: #{convg1_forward.1} parent=11 // pred_fallthru
        _
    $region12: #{convg1_forward.1} parent=5 // pred_fallthru
      _
    %p257 = scmp.lt.s32.totalorder %s14, 2
    // Predicated region
    $region21: #{convg1_forward.1} parent=5 // pred_check
      %p258 = pneg %p257
    $region22: #{convg1_forward.1} parent=5 // pred_check_branch
      %260 = sbr.rel (%p258) target = $region24
    $region23: #{convg1_forward.1} parent=5 // pred_region
      // Predicated region
      $region25: #{convg1_forward.1} parent=23 // pred_check
        %p261 = pneg %p48
      $region26: #{convg1_forward.1} parent=23 // pred_check_branch
        %263 = sbr.rel (%p261) target = $region28
      $region27: #{convg1_forward.1} parent=23 // pred_region
        %s264 = smul.u32 2, %s22
        %p265 = scmp.lt.s32.totalorder %s21, 1
        %s266 = scalar_select %p265, %s21, 1
        %p267 = scmp.lt.s32.totalorder %s264, 1
        %s268 = scalar_select %p267, %s264, 1
        %s269 = smul.addr %s266, 10
        %s270 = sadd.s32 %s268, %s269
        %s271 = smul.addr %s270, 8
        %s272 = scalar_lea.vmem %s0, %s271
        %s273 = smul.u32 2, %s22
      $region28: #{convg1_forward.1} parent=23 // pred_fallthru
        _
      // Predicated region
      $region29: #{convg1_forward.1} parent=23 // pred_check
        %p274 = pneg %p118
      $region30: #{convg1_forward.1} parent=23 // pred_check_branch
        %276 = sbr.rel (%p274) target = $region32
      $region31: #{convg1_forward.1} parent=23 // pred_region
        %s277 = smul.u32 2, %s22
        %p278 = scmp.lt.s32.totalorder %s21, 1
        %s279 = scalar_select %p278, %s21, 1
        %p280 = scmp.lt.s32.totalorder %s277, 1
        %s281 = scalar_select %p280, %s277, 1
        %s282 = smul.addr %s279, 2
        %s283 = sadd.s32 %s281, %s282
        %s284 = smul.addr %s283, 8
        %s285 = scalar_lea.vmem %s3, %s284
        %s286 = smul.u32 2, %s22
      $region32: #{convg1_forward.1} parent=23 // pred_fallthru
        _
    $region24: #{convg1_forward.1} parent=5 // pred_fallthru
      _
    %p287 = scmp.le.s32.totalorder 1, %s14
    %p288 = scmp.lt.s32.totalorder %s14, 3
    %p289 = pnand %p287, %p288
    %p290 = pneg %p289
    // Predicated region
    $region33: #{convg1_forward.1} parent=5 // pred_check
      _
    $region34: #{convg1_forward.1} parent=5 // pred_check_branch
      %292 = sbr.rel (%p289) target = $region36
    $region35: #{convg1_forward.1} parent=5 // pred_region
      %s293 = ssub.s32 %s14, 1
      %s294 = smul.u32 2, %s24
      %p295 = scmp.lt.s32.totalorder %s23, 1
      %s296 = scalar_select %p295, %s23, 1
      %p297 = scmp.lt.s32.totalorder %s294, 1
      %s298 = scalar_select %p297, %s294, 1
      %s299 = smul.addr %s296, 10
      %s300 = sadd.s32 %s298, %s299
      %s301 = smul.addr %s300, 8
      %s302 = scalar_lea.vmem %s0, %s301
      %p303 = pneg %p54
      %p304 = pneg %p51
      %p305 = pneg %p75
      %p306 = pneg %p72
      %p307 = pneg %p96
      %p308 = pneg %p93
      %s309 = smul.u32 2, %s24
      %p310 = scmp.lt.s32.totalorder %s23, 1
      %s311 = scalar_select %p310, %s23, 1
      %p312 = scmp.lt.s32.totalorder %s309, 1
      %s313 = scalar_select %p312, %s309, 1
      %s314 = smul.addr %s311, 2
      %s315 = sadd.s32 %s313, %s314
      %s316 = smul.addr %s315, 8
      %s317 = scalar_lea.vmem %s3, %s316
      %p318 = pneg %p124
      %p319 = pneg %p121
      %p320 = pneg %p152
      %p321 = pneg %p149
      %s322 = smul.u32 2, %s24
      %p323 = scmp.lt.s32.totalorder %s23, 1
      %s324 = scalar_select %p323, %s23, 1
      %p325 = scmp.lt.s32.totalorder %s322, 1
      %s326 = scalar_select %p325, %s322, 1
      %s327 = smul.addr %s324, 2
      %s328 = sadd.s32 %s326, %s327
      %s329 = smul.addr %s328, 8
      %s330 = scalar_lea.vmem %s4, %s329
      %p331 = pneg %p180
      %p332 = pneg %p177
      %s333 = smul.u32 2, %s24
      %p334 = scmp.lt.s32.totalorder %s23, 1
      %s335 = scalar_select %p334, %s23, 1
      %p336 = scmp.lt.s32.totalorder %s333, 1
      %s337 = scalar_select %p336, %s333, 1
      %s338 = smul.addr %s335, 2
      %s339 = sadd.s32 %s337, %s338
      %s340 = smul.addr %s339, 8
      %s341 = scalar_lea.vmem %s5, %s340
      %p342 = pneg %p208
      %p343 = pneg %p205
      %s344 = smul.u32 2, %s24
      %p345 = scmp.lt.s32.totalorder %s23, 1
      %s346 = scalar_select %p345, %s23, 1
      %p347 = scmp.lt.s32.totalorder %s344, 1
      %s348 = scalar_select %p347, %s344, 1
      %s349 = smul.addr %s346, 2
      %s350 = sadd.s32 %s348, %s349
      %s351 = smul.addr %s350, 8
      %s352 = scalar_lea.vmem %s6, %s351
      %p353 = pneg %p236
      %p354 = pneg %p233
      %s355 = smul.u32 2, %s24
      %p356 = scmp.lt.s32.totalorder %s23, 1
      %s357 = scalar_select %p356, %s23, 1
      %p358 = scmp.lt.s32.totalorder %s355, 1
      %s359 = scalar_select %p358, %s355, 1
      %s360 = smul.addr %s357, 2
      %s361 = sadd.s32 %s359, %s360
      %s362 = smul.addr %s361, 8
      %s363 = scalar_lea.vmem %s7, %s362
      %s364 = smul.u32 2, %s24
      %p365 = scmp.lt.s32.totalorder %s23, 1
      %s366 = scalar_select %p365, %s23, 1
      %p367 = scmp.lt.s32.totalorder %s364, 1
      %s368 = scalar_select %p367, %s364, 1
      %s369 = smul.addr %s366, 10
      %s370 = sadd.s32 %s368, %s369
      %s371 = smul.addr %s370, 8
      %s372 = scalar_lea.vmem %s0, %s371
      %s373 = smul.u32 2, %s24
      %s374 = smul.u32 2, %s24
      %p375 = scmp.lt.s32.totalorder %s23, 1
      %s376 = scalar_select %p375, %s23, 1
      %p377 = scmp.lt.s32.totalorder %s374, 1
      %s378 = scalar_select %p377, %s374, 1
      %s379 = smul.addr %s376, 2
      %s380 = sadd.s32 %s378, %s379
      %s381 = smul.addr %s380, 8
      %s382 = scalar_lea.vmem %s3, %s381
      %s383 = smul.u32 2, %s24
      %s384 = smul.u32 2, %s24
      %p385 = scmp.lt.s32.totalorder %s23, 1
      %s386 = scalar_select %p385, %s23, 1
      %p387 = scmp.lt.s32.totalorder %s384, 1
      %s388 = scalar_select %p387, %s384, 1
      %s389 = smul.addr %s386, 2
      %s390 = sadd.s32 %s388, %s389
      %s391 = smul.addr %s390, 8
      %s392 = scalar_lea.vmem %s4, %s391
      %s393 = smul.u32 2, %s24
      %s394 = smul.u32 2, %s24
      %p395 = scmp.lt.s32.totalorder %s23, 1
      %s396 = scalar_select %p395, %s23, 1
      %p397 = scmp.lt.s32.totalorder %s394, 1
      %s398 = scalar_select %p397, %s394, 1
      %s399 = smul.addr %s396, 2
      %s400 = sadd.s32 %s398, %s399
      %s401 = smul.addr %s400, 8
      %s402 = scalar_lea.vmem %s5, %s401
      %s403 = smul.u32 2, %s24
      %s404 = smul.u32 2, %s24
      %p405 = scmp.lt.s32.totalorder %s23, 1
      %s406 = scalar_select %p405, %s23, 1
      %p407 = scmp.lt.s32.totalorder %s404, 1
      %s408 = scalar_select %p407, %s404, 1
      %s409 = smul.addr %s406, 2
      %s410 = sadd.s32 %s408, %s409
      %s411 = smul.addr %s410, 8
      %s412 = scalar_lea.vmem %s6, %s411
      %s413 = smul.u32 2, %s24
      %s414 = smul.u32 2, %s24
      %p415 = scmp.lt.s32.totalorder %s23, 1
      %s416 = scalar_select %p415, %s23, 1
      %p417 = scmp.lt.s32.totalorder %s414, 1
      %s418 = scalar_select %p417, %s414, 1
      %s419 = smul.addr %s416, 2
      %s420 = sadd.s32 %s418, %s419
      %s421 = smul.addr %s420, 8
      %s422 = scalar_lea.vmem %s7, %s421
      %s423 = smul.u32 2, %s24
      %v424 = vld [vmem:[%s1] sm:$0xff]
      %v425 = vld [vmem:[%s372] sm:$0xff]
      %v426 = vld [vmem:[%s372 + $0x8] sm:$0xff]
      %v427 = vld [vmem:[%s372 + $0x10] sm:$0xff]
      %v428 = vld [vmem:[%s372 + $0x18] sm:$0xff]
      %v429 = vld [vmem:[%s372 + $0x20] sm:$0xff]
      %v430 = vld [vmem:[%s372 + $0x28] sm:$0xff]
      %v431 = vld [vmem:[%s372 + $0x30] sm:$0xff]
      %v432 = vld [vmem:[%s372 + $0x38] sm:$0xff]
      %v433 = vld [vmem:[%s372 + $0x40] sm:$0xf]
      %v434 = vld [vmem:[%s372 + $0x48] sm:$0xf]
      %v435 = vld [vmem:[%s2] sm:$0xff]
      %437 = vset.pattern.permute.xlu0 0
      %438 = vperm.xlu0 %437, %v435
      %v439 = vpop.permute.xlu0 %438
      %vm441 = vcmask 293888
      %v443 = vsel %vm441, %v424, 0
      %vm445 = vcmask 1043456
      %v447 = vsel %vm445, %v433, 0
      %v450 = vsel %vm445, %v434, 0
      %452 = vmatpush.msra.mxu0 0.0
      %453 = vmatpush.msra.mxu0 0.0
      %454 = vmatpush.msra.mxu0 0.0
      %455 = vmatpush.msra.mxu0 0.0
      %456 = vmatpush.msra.mxu0 0.0
      %457 = vmatpush.msra.mxu0 0.0
      %458 = vmatpush.msra.mxu0 0.0
      %459 = vmatpush.msra.mxu0 0.0
      %460 = vmatpush.msra.mxu0 0.0
      %461 = vmatpush.msra.mxu0 0.0
      %462 = vmatpush.msra.mxu0 0.0
      %463 = vmatpush.msra.mxu0 %v447
      %464 = vmatpush.msra.mxu0 %v431
      %465 = vmatpush.msra.mxu0 %v429
      %466 = vmatpush.msra.mxu0 %v427
      %467 = vmatpush.msra.mxu0 %v425
      %468 = vmatmul.f32.gmra.mxu0 %v443
      %v469 = vpop.f32.mrf.mxu0
      %v470 = vadd.f32 %v439, %v469
      %471 = vdwg.mxu0
      %472 = vmatpush.msra.mxu0 0.0
      %473 = vmatpush.msra.mxu0 0.0
      %474 = vmatpush.msra.mxu0 0.0
      %475 = vmatpush.msra.mxu0 0.0
      %476 = vmatpush.msra.mxu0 0.0
      %477 = vmatpush.msra.mxu0 0.0
      %478 = vmatpush.msra.mxu0 0.0
      %479 = vmatpush.msra.mxu0 0.0
      %480 = vmatpush.msra.mxu0 0.0
      %481 = vmatpush.msra.mxu0 0.0
      %482 = vmatpush.msra.mxu0 0.0
      %483 = vmatpush.msra.mxu0 %v450
      %484 = vmatpush.msra.mxu0 %v432
      %485 = vmatpush.msra.mxu0 %v430
      %486 = vmatpush.msra.mxu0 %v428
      %487 = vmatpush.msra.mxu0 %v426
      %488 = vmatmul.f32.gmra.mxu0 %v443
      %v489 = vpop.f32.mrf.mxu0
      %v490 = vadd.f32 %v439, %v489
      %491 = vdwg.mxu0
      %492 = vset.pattern.permute.xlu0 2
      %493 = vperm.xlu0 %492, %v435
      %v494 = vpop.permute.xlu0 %493
      %v496 = vmul.f32 %v494, %v470
      %v497 = vmul.f32 %v494, %v490
      %498 = vset.pattern.permute.xlu0 3
      %499 = vperm.xlu0 %498, %v435
      %v500 = vpop.permute.xlu0 %499
      %v502 = vadd.f32 %v496, %v500
      %v503 = vadd.f32 %v497, %v500
      %v504 = vxor.u32 %v502, 2147483648
      %v505 = vxor.u32 %v503, 2147483648
      %v506 = vmul.f32 %v504, 1.442695
      %v507 = vpow.pop %v506
      %v508 = vmul.f32 %v505, 1.442695
      %v509 = vpow.pop %v508
      %v510 = vadd.f32 %v507, 1.0
      %v511 = vadd.f32 %v509, 1.0
      %v512 = vrcp.pop %v510
      %v513 = vmul.f32 %v510, %v512
      %v514 = vsub.f32 1.0, %v513
      %v515 = vmul.f32 %v512, %v514
      %v516 = vadd.f32 %v512, %v515
      %vm517 = vweird.f32 %v510
      %vm518 = vweird.f32 %v512
      %vm519 = vmor %vm517, %vm518
      %v520 = vsel %vm519, %v512, %v516
      %v521 = vand.u32 2147483647, %v510
      %vm522 = vcmp.eq.f32.partialorder %v521, 8.507059e+37
      %v523 = vand.u32 %v510, 2147483648
      %v524 = vor.u32 1.1754944e-38, %v523
      %v525 = vsel %vm522, %v524, %v520
      %v526 = vmul.f32 1.0, %v525
      %v527 = vrcp.pop %v511
      %v528 = vmul.f32 %v511, %v527
      %v529 = vsub.f32 1.0, %v528
      %v530 = vmul.f32 %v527, %v529
      %v531 = vadd.f32 %v527, %v530
      %vm532 = vweird.f32 %v511
      %vm533 = vweird.f32 %v527
      %vm534 = vmor %vm532, %vm533
      %v535 = vsel %vm534, %v527, %v531
      %v536 = vand.u32 2147483647, %v511
      %vm537 = vcmp.eq.f32.partialorder %v536, 8.507059e+37
      %v538 = vand.u32 %v511, 2147483648
      %v539 = vor.u32 1.1754944e-38, %v538
      %v540 = vsel %vm537, %v539, %v535
      %v541 = vmul.f32 1.0, %v540
      %542 = vset.pattern.permute.xlu0 1
      %543 = vperm.xlu0 %542, %v435
      %v544 = vpop.permute.xlu0 %543
      %v546 = vmul.f32 %v544, %v526
      %v547 = vmul.f32 %v544, %v541
      %548 = vset.pattern.permute.xlu0 4
      %549 = vperm.xlu0 %548, %v435
      %v550 = vpop.permute.xlu0 %549
      %v552 = vmul.f32 %v550, %v470
      %v553 = vmul.f32 %v550, %v490
      %v554 = vadd.f32 %v546, %v552
      %v555 = vadd.f32 %v547, %v553
      %556 = vset.pattern.permute.xlu0 5
      %557 = vperm.xlu0 %556, %v435
      %v558 = vpop.permute.xlu0 %557
      %v560 = vadd.f32 %v554, %v558
      %v561 = vadd.f32 %v555, %v558
      %562 = vset.pattern.permute.xlu0 7
      %563 = vperm.xlu0 %562, %v435
      %v564 = vpop.permute.xlu0 %563
      %v566 = vmul.f32 %v564, %v470
      %v567 = vmul.f32 %v564, %v490
      %568 = vset.pattern.permute.xlu0 8
      %569 = vperm.xlu0 %568, %v435
      %v570 = vpop.permute.xlu0 %569
      %v572 = vadd.f32 %v566, %v570
      %v573 = vadd.f32 %v567, %v570
      %v574 = vxor.u32 %v572, 2147483648
      %v575 = vxor.u32 %v573, 2147483648
      %v576 = vmul.f32 %v574, 1.442695
      %v577 = vpow.pop %v576
      %v578 = vmul.f32 %v575, 1.442695
      %v579 = vpow.pop %v578
      %v580 = vadd.f32 %v577, 1.0
      %v581 = vadd.f32 %v579, 1.0
      %v582 = vrcp.pop %v580
      %v583 = vmul.f32 %v580, %v582
      %v584 = vsub.f32 1.0, %v583
      %v585 = vmul.f32 %v582, %v584
      %v586 = vadd.f32 %v582, %v585
      %vm587 = vweird.f32 %v580
      %vm588 = vweird.f32 %v582
      %vm589 = vmor %vm587, %vm588
      %v590 = vsel %vm589, %v582, %v586
      %v591 = vand.u32 2147483647, %v580
      %vm592 = vcmp.eq.f32.partialorder %v591, 8.507059e+37
      %v593 = vand.u32 %v580, 2147483648
      %v594 = vor.u32 1.1754944e-38, %v593
      %v595 = vsel %vm592, %v594, %v590
      %v596 = vmul.f32 1.0, %v595
      %v597 = vrcp.pop %v581
      %v598 = vmul.f32 %v581, %v597
      %v599 = vsub.f32 1.0, %v598
      %v600 = vmul.f32 %v597, %v599
      %v601 = vadd.f32 %v597, %v600
      %vm602 = vweird.f32 %v581
      %vm603 = vweird.f32 %v597
      %vm604 = vmor %vm602, %vm603
      %v605 = vsel %vm604, %v597, %v601
      %v606 = vand.u32 2147483647, %v581
      %vm607 = vcmp.eq.f32.partialorder %v606, 8.507059e+37
      %v608 = vand.u32 %v581, 2147483648
      %v609 = vor.u32 1.1754944e-38, %v608
      %v610 = vsel %vm607, %v609, %v605
      %v611 = vmul.f32 1.0, %v610
      %612 = vset.pattern.permute.xlu0 6
      %613 = vperm.xlu0 %612, %v435
      %v614 = vpop.permute.xlu0 %613
      %v616 = vmul.f32 %v614, %v596
      %v617 = vmul.f32 %v614, %v611
      %618 = vset.pattern.permute.xlu0 9
      %619 = vperm.xlu0 %618, %v435
      %v620 = vpop.permute.xlu0 %619
      %v622 = vmul.f32 %v620, %v470
      %v623 = vmul.f32 %v620, %v490
      %v624 = vadd.f32 %v616, %v622
      %v625 = vadd.f32 %v617, %v623
      %626 = vset.pattern.permute.xlu0 10
      %627 = vperm.xlu0 %626, %v435
      %v628 = vpop.permute.xlu0 %627
      %v630 = vadd.f32 %v624, %v628
      %v631 = vadd.f32 %v625, %v628
      %v632 = vld [vmem:[%s382] sm:$0xff]
      %v633 = vld [vmem:[%s382 + $0x8] sm:$0xff]
      %v634 = vmul.f32 %v632, %v630
      %v635 = vmul.f32 %v633, %v631
      %v636 = vsub.f32 1.0, %v630
      %v637 = vsub.f32 1.0, %v631
      %v638 = vmul.f32 %v560, %v636
      %v639 = vmul.f32 %v561, %v637
      %v640 = vadd.f32 %v634, %v638
      %v641 = vadd.f32 %v635, %v639
      %642 = vst [vmem:[%s392] sm:$0xff] %v640
      %643 = vst [vmem:[%s392 + $0x8] sm:$0xff] %v641
      %644 = vst [vmem:[%s402] sm:$0xff] %v470
      %645 = vst [vmem:[%s402 + $0x8] sm:$0xff] %v490
      %646 = vst [vmem:[%s412] sm:$0xff] %v560
      %647 = vst [vmem:[%s412 + $0x8] sm:$0xff] %v561
      %648 = vst [vmem:[%s422] sm:$0xff] %v630
      %649 = vst [vmem:[%s422 + $0x8] sm:$0xff] %v631
      %s650 = smul.u32 2, %s24
      %p651 = scmp.lt.s32.totalorder %s23, 1
      %s652 = scalar_select %p651, %s23, 1
      %p653 = scmp.lt.s32.totalorder %s650, 1
      %s654 = scalar_select %p653, %s650, 1
      %s655 = smul.addr %s652, 2
      %s656 = sadd.s32 %s654, %s655
      %s657 = smul.addr %s656, 8
      %s658 = scalar_lea.vmem %s4, %s657
      %s659 = smul.u32 2, %s24
      %p660 = scmp.lt.s32.totalorder %s23, 1
      %s661 = scalar_select %p660, %s23, 1
      %p662 = scmp.lt.s32.totalorder %s659, 1
      %s663 = scalar_select %p662, %s659, 1
      %s664 = smul.addr %s661, 2
      %s665 = sadd.s32 %s663, %s664
      %s666 = smul.addr %s665, 8
      %s667 = scalar_lea.vmem %s5, %s666
      %s668 = smul.u32 2, %s24
      %p669 = scmp.lt.s32.totalorder %s23, 1
      %s670 = scalar_select %p669, %s23, 1
      %p671 = scmp.lt.s32.totalorder %s668, 1
      %s672 = scalar_select %p671, %s668, 1
      %s673 = smul.addr %s670, 2
      %s674 = sadd.s32 %s672, %s673
      %s675 = smul.addr %s674, 8
      %s676 = scalar_lea.vmem %s6, %s675
      %s677 = smul.u32 2, %s24
      %p678 = scmp.lt.s32.totalorder %s23, 1
      %s679 = scalar_select %p678, %s23, 1
      %p680 = scmp.lt.s32.totalorder %s677, 1
      %s681 = scalar_select %p680, %s677, 1
      %s682 = smul.addr %s679, 2
      %s683 = sadd.s32 %s681, %s682
      %s684 = smul.addr %s683, 8
      %s685 = scalar_lea.vmem %s7, %s684
      // Predicated region
      $region37: #{convg1_forward.1} parent=35 // pred_check
        %p686 = pneg %p149
      $region38: #{convg1_forward.1} parent=35 // pred_check_branch
        %688 = sbr.rel (%p686) target = $region40
      $region39: #{convg1_forward.1} parent=35 // pred_region
        %s689 = smul.u32 2, %s24
      $region40: #{convg1_forward.1} parent=35 // pred_fallthru
        _
      // Predicated region
      $region41: #{convg1_forward.1} parent=35 // pred_check
        %p690 = pneg %p177
      $region42: #{convg1_forward.1} parent=35 // pred_check_branch
        %692 = sbr.rel (%p690) target = $region44
      $region43: #{convg1_forward.1} parent=35 // pred_region
        %s693 = smul.u32 2, %s24
      $region44: #{convg1_forward.1} parent=35 // pred_fallthru
        _
      // Predicated region
      $region45: #{convg1_forward.1} parent=35 // pred_check
        %p694 = pneg %p205
      $region46: #{convg1_forward.1} parent=35 // pred_check_branch
        %696 = sbr.rel (%p694) target = $region48
      $region47: #{convg1_forward.1} parent=35 // pred_region
        %s697 = smul.u32 2, %s24
      $region48: #{convg1_forward.1} parent=35 // pred_fallthru
        _
      // Predicated region
      $region49: #{convg1_forward.1} parent=35 // pred_check
        %p698 = pneg %p233
      $region50: #{convg1_forward.1} parent=35 // pred_check_branch
        %700 = sbr.rel (%p698) target = $region52
      $region51: #{convg1_forward.1} parent=35 // pred_region
        %s701 = smul.u32 2, %s24
      $region52: #{convg1_forward.1} parent=35 // pred_fallthru
        _
    $region36: #{convg1_forward.1} parent=5 // pred_fallthru
      _
    %p702 = scmp.le.s32.totalorder 2, %s14
    // Predicated region
    $region53: #{convg1_forward.1} parent=5 // pred_check
      %p703 = pneg %p702
    $region54: #{convg1_forward.1} parent=5 // pred_check_branch
      %705 = sbr.rel (%p703) target = $region56
    $region55: #{convg1_forward.1} parent=5 // pred_region
      %s706 = ssub.s32 %s14, 2
      // Predicated region
      $region57: #{convg1_forward.1} parent=55 // pred_check
        %p707 = pneg %p155
      $region58: #{convg1_forward.1} parent=55 // pred_check_branch
        %709 = sbr.rel (%p707) target = $region60
      $region59: #{convg1_forward.1} parent=55 // pred_region
        %s710 = smul.u32 2, %s26
        %p711 = scmp.lt.s32.totalorder %s25, 1
        %s712 = scalar_select %p711, %s25, 1
        %p713 = scmp.lt.s32.totalorder %s710, 1
        %s714 = scalar_select %p713, %s710, 1
        %s715 = smul.addr %s712, 2
        %s716 = sadd.s32 %s714, %s715
        %s717 = smul.addr %s716, 8
        %s718 = scalar_lea.vmem %s4, %s717
      $region60: #{convg1_forward.1} parent=55 // pred_fallthru
        _
      // Predicated region
      $region61: #{convg1_forward.1} parent=55 // pred_check
        %p719 = pneg %p183
      $region62: #{convg1_forward.1} parent=55 // pred_check_branch
        %721 = sbr.rel (%p719) target = $region64
      $region63: #{convg1_forward.1} parent=55 // pred_region
        %s722 = smul.u32 2, %s26
        %p723 = scmp.lt.s32.totalorder %s25, 1
        %s724 = scalar_select %p723, %s25, 1
        %p725 = scmp.lt.s32.totalorder %s722, 1
        %s726 = scalar_select %p725, %s722, 1
        %s727 = smul.addr %s724, 2
        %s728 = sadd.s32 %s726, %s727
        %s729 = smul.addr %s728, 8
        %s730 = scalar_lea.vmem %s5, %s729
      $region64: #{convg1_forward.1} parent=55 // pred_fallthru
        _
      // Predicated region
      $region65: #{convg1_forward.1} parent=55 // pred_check
        %p731 = pneg %p211
      $region66: #{convg1_forward.1} parent=55 // pred_check_branch
        %733 = sbr.rel (%p731) target = $region68
      $region67: #{convg1_forward.1} parent=55 // pred_region
        %s734 = smul.u32 2, %s26
        %p735 = scmp.lt.s32.totalorder %s25, 1
        %s736 = scalar_select %p735, %s25, 1
        %p737 = scmp.lt.s32.totalorder %s734, 1
        %s738 = scalar_select %p737, %s734, 1
        %s739 = smul.addr %s736, 2
        %s740 = sadd.s32 %s738, %s739
        %s741 = smul.addr %s740, 8
        %s742 = scalar_lea.vmem %s6, %s741
      $region68: #{convg1_forward.1} parent=55 // pred_fallthru
        _
      // Predicated region
      $region69: #{convg1_forward.1} parent=55 // pred_check
        %p743 = pneg %p239
      $region70: #{convg1_forward.1} parent=55 // pred_check_branch
        %745 = sbr.rel (%p743) target = $region72
      $region71: #{convg1_forward.1} parent=55 // pred_region
        %s746 = smul.u32 2, %s26
        %p747 = scmp.lt.s32.totalorder %s25, 1
        %s748 = scalar_select %p747, %s25, 1
        %p749 = scmp.lt.s32.totalorder %s746, 1
        %s750 = scalar_select %p749, %s746, 1
        %s751 = smul.addr %s748, 2
        %s752 = sadd.s32 %s750, %s751
        %s753 = smul.addr %s752, 8
        %s754 = scalar_lea.vmem %s7, %s753
      $region72: #{convg1_forward.1} parent=55 // pred_fallthru
        _
    $region56: #{convg1_forward.1} parent=5 // pred_fallthru
      _
  $region6: #{convg1_forward.1} parent=0 // loop_footer
    %s18 = sadd.s32 1, %s14
  $region7: #{convg1_forward.1} parent=0 // loop_footer_branch
    %13 = sbr.rel target = $region3
  $region8: #{convg1_forward.1} parent=0 // loop_exit
    _

</llo_original>
